<compile_context>
chip_gen: v7x
topology: tpu7x:2x2x1
jax: 0.10.0
libtpu: 0.0.40
codegen_flags: <defaults>
</compile_context>

<pallas_src>
import jax
import jax.numpy as jnp
from jax.experimental import pallas as pl
from jax.experimental.pallas import tpu as pltpu


def _convt_bias_relu_kernel(x_ref, wt_ref, b_ref, o_ref):
    # x_ref : (1, C_in, t_hw)     bf16  one batch element's channel-major spatial slab
    # wt_ref: (C_out*4, C_in)     bf16  resident across the whole grid
    # b_ref : (C_out*4, 1)        f32   resident across the whole grid
    # o_ref : (1, C_out*4, t_hw)  f32
    acc = jnp.dot(wt_ref[...], x_ref[0], preferred_element_type=jnp.float32)
    acc = acc + b_ref[...]                       # broadcast over the lane (spatial) axis
    o_ref[0] = jnp.maximum(acc, 0.0).astype(o_ref.dtype)


def _pick_spatial_tile(n_batch, hw):
    """Lane-dense spatial tile; keep >= 2 grid steps when possible (v7x has 2 TCs)."""
    cap = 4096                       # out block 128*4096*4B = 2 MiB -> fits VMEM w/ 2x buffering
    if hw > cap:
        return cap                   # multiple of 128; last block may be partial (masked)
    if n_batch == 1 and hw >= 256:   # single batch element: split spatial to get 2 steps
        half = ((hw // 2) + 127) // 128 * 128
        return min(max(half, 128), hw)
    return hw                        # equals the full spatial dim -> always a legal block


def seq_rcnn_c4_predictor_forward(x_nchw, weight, bias, *, compute_dtype=jnp.bfloat16):
    """Equivalent of `F.relu(self.conv5_mask(x))` (ConvTranspose2d k=2, s=2, p=0).

    x_nchw : (N, C_in, H, W) float32
    weight : (C_in, C_out, 2, 2) float32   (PyTorch ConvTranspose2d layout)
    bias   : (C_out,) float32
    returns: (N, C_out, 2H, 2W) float32
    """
    N, C_in, H, W = x_nchw.shape
    C_out = weight.shape[1]
    HW = H * W
    Nout = C_out * 4                 # (c_out, kh, kw) taps; sublane axis of the output block

    # Channel-major operands: NCHW is already (N, C_in, H*W) -> free reshape, no transpose.
    x3 = x_nchw.reshape(N, C_in, HW).astype(compute_dtype)
    w_t = jnp.transpose(weight, (1, 2, 3, 0)).reshape(Nout, C_in).astype(compute_dtype)
    b_col = jnp.repeat(bias, 4).reshape(Nout, 1).astype(jnp.float32)

    t_hw = _pick_spatial_tile(N, HW)
    n_hw = pl.cdiv(HW, t_hw)

    cost = pl.CostEstimate(
        flops=2 * N * HW * C_in * Nout,
        transcendentals=0,
        bytes_accessed=(x3.size * x3.dtype.itemsize
                        + w_t.size * w_t.dtype.itemsize
                        + b_col.size * 4
                        + N * Nout * HW * 4),
    )

    y = pl.pallas_call(
        _convt_bias_relu_kernel,
        out_shape=jax.ShapeDtypeStruct((N, Nout, HW), jnp.float32),
        grid_spec=pltpu.PrefetchScalarGridSpec(
            num_scalar_prefetch=0,
            grid=(N, n_hw),
            in_specs=[
                pl.BlockSpec((1, C_in, t_hw), lambda n, j: (n, 0, j)),  # activations
                pl.BlockSpec((Nout, C_in), lambda n, j: (0, 0)),        # weight (resident)
                pl.BlockSpec((Nout, 1), lambda n, j: (0, 0)),           # bias (resident)
            ],
            out_specs=pl.BlockSpec((1, Nout, t_hw), lambda n, j: (n, 0, j)),
        ),
        compiler_params=pltpu.CompilerParams(
            dimension_semantics=("parallel", "parallel"),
        ),
        cost_estimate=cost,
    )(x3, w_t, b_col)

    # (N, C_out*4, H*W) -> (N, C_out, 2, 2, H, W) -> (N, C_out, H, 2, W, 2) -> (N, C_out, 2H, 2W)
    y = y.reshape(N, C_out, 2, 2, H, W)
    y = jnp.transpose(y, (0, 1, 4, 2, 5, 3)).reshape(N, C_out, 2 * H, 2 * W)
    return y


# ------------------------------- references ----------------------------------

def _reference_convt_relu(x_nchw, weight, bias):
    """PyTorch ConvTranspose2d(k=2, s=2, p=0) + ReLU via lax.conv_general_dilated.

    ConvTranspose2d == input-dilated conv with the spatially flipped, channel-swapped
    kernel: rhs[o, i, kh, kw] = W[i, o, 1-kh, 1-kw].
    """
    rhs = jnp.flip(weight, axis=(2, 3)).transpose(1, 0, 2, 3)   # (C_out, C_in, 2, 2)
    y = jax.lax.conv_general_dilated(
        x_nchw, rhs,
        window_strides=(1, 1),
        padding=[(1, 1), (1, 1)],
        lhs_dilation=(2, 2),
        rhs_dilation=(1, 1),
        dimension_numbers=("NCHW", "OIHW", "NCHW"),
    )
    return jnp.maximum(y + bias.reshape(1, -1, 1, 1), 0.0)


def _reference_convt_relu_einsum(x_nchw, weight, bias):
    """Same op straight from the PyTorch definition (non-overlapping 2x2 taps)."""
    N, C_in, H, W = x_nchw.shape
    C_out = weight.shape[1]
    y = jnp.einsum("nihw,iorc->nohrwc", x_nchw, weight)
    y = y.reshape(N, C_out, 2 * H, 2 * W) + bias.reshape(1, -1, 1, 1)
    return jnp.maximum(y, 0.0)


if __name__ == "__main__":
    key = jax.random.PRNGKey(0)
    k_x, k_w, k_b = jax.random.split(key, 3)

    # Config analogue: USE_FPN=True, default MIX_OPTION -> num_inputs == dim_reduced
    N, C_in, H, W = 2, 32, 16, 16
    dim_reduced = 32

    x = jax.random.normal(k_x, (N, C_in, H, W), dtype=jnp.float32)

    # kaiming_normal_(mode='fan_out', relu) scale for the ConvTranspose2d weight;
    # bias made nonzero here (module init is 0) so the bias path is actually exercised.
    fan = C_in * 2 * 2
    std = (2.0 / fan) ** 0.5
    conv5_mask_w = std * jax.random.normal(k_w, (C_in, dim_reduced, 2, 2), dtype=jnp.float32)
    conv5_mask_b = 0.1 * jax.random.normal(k_b, (dim_reduced,), dtype=jnp.float32)

    fwd = jax.jit(seq_rcnn_c4_predictor_forward)
    y = jax.block_until_ready(fwd(x, conv5_mask_w, conv5_mask_b))
    assert y.shape == (N, dim_reduced, 2 * H, 2 * W), y.shape

    # Apples-to-apples check: the kernel multiplies bf16-rounded operands with f32
    # accumulation, so build the references from the same bf16-rounded values.
    x_r = x.astype(jnp.bfloat16).astype(jnp.float32)
    w_r = conv5_mask_w.astype(jnp.bfloat16).astype(jnp.float32)
    y_ref1 = _reference_convt_relu(x_r, w_r, conv5_mask_b)
    y_ref2 = _reference_convt_relu_einsum(x_r, w_r, conv5_mask_b)

    err1 = float(jnp.max(jnp.abs(y - y_ref1)))
    err2 = float(jnp.max(jnp.abs(y - y_ref2)))
    assert jnp.allclose(y, y_ref1, atol=1e-3, rtol=1e-3), err1
    assert jnp.allclose(y, y_ref2, atol=1e-3, rtol=1e-3), err2

    print("KERNEL_OK")
</pallas_src>

<mosaic_0001>
module attributes {stable_mosaic.version = 11 : i64} {
  func.func @_convt_bias_relu_kernel(%arg0: i32, %arg1: i32, %arg2: memref<1x32x256xbf16, #tpu.memory_space<vmem>>, %arg3: memref<128x32xbf16, #tpu.memory_space<vmem>>, %arg4: memref<128x1xf32, #tpu.memory_space<vmem>>, %arg5: memref<1x128x256xf32, #tpu.memory_space<vmem>>) attributes {dimension_semantics = [#tpu.dimension_semantics<parallel>, #tpu.dimension_semantics<parallel>], iteration_bounds = array<i64: 2, 1>, scalar_prefetch = 0 : i64, scratch_operands = 0 : i64, tpu.core_type = #tpu.core_type<tc>, window_params = [{transform_indices = @transform_0, window_bounds = array<i64: 1, 32, 256>}, {pipeline_mode = #tpu.pipeline_mode<synchronous>, transform_indices = @transform_1, window_bounds = array<i64: 128, 32>}, {pipeline_mode = #tpu.pipeline_mode<synchronous>, transform_indices = @transform_2, window_bounds = array<i64: 128, 1>}, {transform_indices = @transform_3, window_bounds = array<i64: 1, 128, 256>}]} {
    %c0 = arith.constant 0 : index
    %c0_0 = arith.constant 0 : index
    %0 = vector.load %arg3[%c0, %c0_0] : memref<128x32xbf16, #tpu.memory_space<vmem>>, vector<128x32xbf16>
    %c0_1 = arith.constant 0 : index
    %c0_2 = arith.constant 0 : index
    %c0_3 = arith.constant 0 : index
    %1 = vector.load %arg2[%c0_1, %c0_2, %c0_3] : memref<1x32x256xbf16, #tpu.memory_space<vmem>>, vector<1x32x256xbf16>
    %2 = vector.shape_cast %1 : vector<1x32x256xbf16> to vector<32x256xbf16>
    %cst = arith.constant dense<0.000000e+00> : vector<128x256xf32>
    %3 = tpu.matmul %0, %2, %cst {dimension_numbers = #tpu.dot_dimension_numbers<[1], [0], [0], [1], [0, 0, 1, 1], [], []>} : vector<128x32xbf16>, vector<32x256xbf16>, vector<128x256xf32> -> vector<128x256xf32>
    %c0_4 = arith.constant 0 : index
    %c0_5 = arith.constant 0 : index
    %4 = vector.load %arg4[%c0_4, %c0_5] : memref<128x1xf32, #tpu.memory_space<vmem>>, vector<128x1xf32>
    %5 = vector.broadcast %4 : vector<128x1xf32> to vector<128x256xf32>
    %6 = arith.addf %3, %5 : vector<128x256xf32>
    %cst_6 = arith.constant 0.000000e+00 : f32
    %7 = vector.broadcast %cst_6 : f32 to vector<128x256xf32>
    %8 = arith.maximumf %6, %7 : vector<128x256xf32>
    %c0_7 = arith.constant 0 : index
    %c0_8 = arith.constant 0 : index
    %c0_9 = arith.constant 0 : index
    %9 = vector.load %arg5[%c0_7, %c0_8, %c0_9] : memref<1x128x256xf32, #tpu.memory_space<vmem>>, vector<1x128x256xf32>
    %10 = vector.shape_cast %9 : vector<1x128x256xf32> to vector<128x256xf32>
    %11 = vector.shape_cast %8 : vector<128x256xf32> to vector<1x128x256xf32>
    tpu.vector_store %arg5[%c0_7, %c0_8, %c0_9], %11 {strides = array<i32>} : memref<1x128x256xf32, #tpu.memory_space<vmem>>, vector<1x128x256xf32>,
    return
  }
  func.func @transform_0(%arg0: i32, %arg1: i32) -> (i32, i32, i32) {
    %c0_i32 = arith.constant 0 : i32
    %c0_i32_0 = arith.constant 0 : i32
    return %arg0, %c0_i32, %arg1 : i32, i32, i32
  }
  func.func @transform_1(%arg0: i32, %arg1: i32) -> (i32, i32) {
    %c0_i32 = arith.constant 0 : i32
    %c0_i32_0 = arith.constant 0 : i32
    %c0_i32_1 = arith.constant 0 : i32
    return %c0_i32, %c0_i32_0 : i32, i32
  }
  func.func @transform_2(%arg0: i32, %arg1: i32) -> (i32, i32) {
    %c0_i32 = arith.constant 0 : i32
    %c0_i32_0 = arith.constant 0 : i32
    %c0_i32_1 = arith.constant 0 : i32
    return %c0_i32, %c0_i32_0 : i32, i32
  }
  func.func @transform_3(%arg0: i32, %arg1: i32) -> (i32, i32, i32) {
    %c0_i32 = arith.constant 0 : i32
    %c0_i32_0 = arith.constant 0 : i32
    return %arg0, %c0_i32, %arg1 : i32, i32, i32
  }
}

</mosaic_0001>

<llo_original>
// kernel: seq_rcnn_c4_predictor_forward.1
$region0: #{seq_rcnn_c4_predictor_forward.1}
  #allocation0 [shape = 'u32[]', space=smem, size = 0x4, offset = 0x4, fixed_abs, tag = 'smem constant byte address 0x4 - core index']
  #allocation1 [shape = 'u32[144,128]{1,0:T(1,128)}', space=vmem, size = 0x12000, scoped, tag = 'internal scratch']
  %s0 = inlined_call_operand.vmem [shape: bf16[2,32,256], index: 0, kind: input, shape index: {}]
  %s1 = inlined_call_operand.vmem [shape: bf16[128,32], index: 1, kind: input, shape index: {}]
  %s2 = inlined_call_operand.vmem [shape: f32[128,1], index: 2, kind: input, shape index: {}]
  %s3 = inlined_call_operand.vmem [shape: f32[2,128,256], index: 3, kind: output, shape index: {}]
  %s4 = sld [smem:[#allocation0]]
  $region45: #{seq_rcnn_c4_predictor_forward.1} parent=0
    _
  %s6 = ssub.s32 1, %s4
  %s7 = scalar_select 0, %s6, %s4
  loop: start=0, step=1, limit=4
  $region2: #{seq_rcnn_c4_predictor_forward.1} parent=0 // loop_pre_header
    _
  $region3: #{seq_rcnn_c4_predictor_forward.1} parent=0 // loop_header
    %s9 = sphi 0, %s13
    %p10 = scmp.ge.s32.totalorder %s9, 4
    %s16 = sphi 0, %s28
    %s17 = sphi 0, %s24
    %s18 = sphi 0, %s16
    %s19 = sphi 0, %s17
    %s20 = sphi 0, %s18
    %s21 = sphi 0, %s19
    %s33 = sphi 0, %s35
    %s36 = sphi 0, %s33
    %s37 = sphi 0, %s36
    %s53 = sphi 0, %s37
    %s57 = sphi 0, %s57
    %s59 = sphi 0, %s57
    %s60 = sphi 0, %s59
    %s74 = sphi 0, %s60
    %s78 = sphi 0, %s78
    %s80 = sphi 0, %s78
    %s81 = sphi 0, %s80
    %s95 = sphi 0, %s81
    %s103 = sphi 0, %s105
    %s106 = sphi 0, %s103
    %s107 = sphi 0, %s106
    %s123 = sphi 0, %s107
  $region4: #{seq_rcnn_c4_predictor_forward.1} parent=0 // loop_header_branch
    %12 = sbr.rel (%p10) target = $region8
  $region5: #{seq_rcnn_c4_predictor_forward.1} parent=0 // loop_body
    %s14 = ssub.s32 %s9, 1
    %s15 = ssub.s32 %s9, 2
    %s22 = sadd.s32 1, %s17
    %p23 = scmp.ge.s32.totalorder %s22, 1
    %s24 = scalar_select %p23, 0, %s22
    %s25 = sadd.s32 1, %s16
    %s26 = scalar_select %p23, %s25, %s16
    %p27 = scmp.ge.s32.totalorder %s26, 2
    %s28 = scalar_select %p27, 0, %s26
    %s29 = ssub.s32 %s16, %s28
    %s30 = ssub.s32 %s17, %s24
    %s31 = sor.u32 %s29, %s30
    %p32 = scmp.eq.s32.totalorder %s31, 0
    %s34 = sadd.s32 %s33, 1
    %s35 = scalar_select %p32, %s33, %s34
    %p38 = pneg %p32
    %p39 = scmp.eq.s32.totalorder %s9, 1
    %p40 = por %p38, %p39
    %p41 = scmp.ne.s32.totalorder %s33, %s36
    %p42 = scmp.eq.s32.totalorder %s9, 0
    %p43 = por %p41, %p42
    %p44 = scmp.ne.s32.totalorder %s33, %s36
    %p45 = scmp.eq.s32.totalorder %s14, 1
    %p46 = por %p44, %p45
    %p47 = scmp.ne.s32.totalorder %s36, %s37
    %p48 = scmp.eq.s32.totalorder %s14, 0
    %p49 = por %p47, %p48
    %p50 = scmp.ne.s32.totalorder %s36, %s37
    %p51 = scmp.eq.s32.totalorder %s15, 1
    %p52 = por %p50, %p51
    %p54 = scmp.ne.s32.totalorder %s37, %s53
    %p55 = scmp.eq.s32.totalorder %s15, 0
    %p56 = por %p54, %p55
    %s58 = sadd.s32 %s57, 1
    %p61 = scmp.eq.s32.totalorder %s9, 1
    %p62 = scmp.ne.s32.totalorder %s57, %s59
    %p63 = scmp.eq.s32.totalorder %s9, 0
    %p64 = por %p62, %p63
    %p65 = scmp.ne.s32.totalorder %s57, %s59
    %p66 = scmp.eq.s32.totalorder %s14, 1
    %p67 = por %p65, %p66
    %p68 = scmp.ne.s32.totalorder %s59, %s60
    %p69 = scmp.eq.s32.totalorder %s14, 0
    %p70 = por %p68, %p69
    %p71 = scmp.ne.s32.totalorder %s59, %s60
    %p72 = scmp.eq.s32.totalorder %s15, 1
    %p73 = por %p71, %p72
    %p75 = scmp.ne.s32.totalorder %s60, %s74
    %p76 = scmp.eq.s32.totalorder %s15, 0
    %p77 = por %p75, %p76
    %s79 = sadd.s32 %s78, 1
    %p82 = scmp.eq.s32.totalorder %s9, 1
    %p83 = scmp.ne.s32.totalorder %s78, %s80
    %p84 = scmp.eq.s32.totalorder %s9, 0
    %p85 = por %p83, %p84
    %p86 = scmp.ne.s32.totalorder %s78, %s80
    %p87 = scmp.eq.s32.totalorder %s14, 1
    %p88 = por %p86, %p87
    %p89 = scmp.ne.s32.totalorder %s80, %s81
    %p90 = scmp.eq.s32.totalorder %s14, 0
    %p91 = por %p89, %p90
    %p92 = scmp.ne.s32.totalorder %s80, %s81
    %p93 = scmp.eq.s32.totalorder %s15, 1
    %p94 = por %p92, %p93
    %p96 = scmp.ne.s32.totalorder %s81, %s95
    %p97 = scmp.eq.s32.totalorder %s15, 0
    %p98 = por %p96, %p97
    %s99 = ssub.s32 %s16, %s28
    %s100 = ssub.s32 %s17, %s24
    %s101 = sor.u32 %s99, %s100
    %p102 = scmp.eq.s32.totalorder %s101, 0
    %s104 = sadd.s32 %s103, 1
    %s105 = scalar_select %p102, %s103, %s104
    %p108 = pneg %p102
    %p109 = scmp.eq.s32.totalorder %s9, 1
    %p110 = por %p108, %p109
    %p111 = scmp.ne.s32.totalorder %s103, %s106
    %p112 = scmp.eq.s32.totalorder %s9, 0
    %p113 = por %p111, %p112
    %p114 = scmp.ne.s32.totalorder %s103, %s106
    %p115 = scmp.eq.s32.totalorder %s14, 1
    %p116 = por %p114, %p115
    %p117 = scmp.ne.s32.totalorder %s106, %s107
    %p118 = scmp.eq.s32.totalorder %s14, 0
    %p119 = por %p117, %p118
    %p120 = scmp.ne.s32.totalorder %s106, %s107
    %p121 = scmp.eq.s32.totalorder %s15, 1
    %p122 = por %p120, %p121
    %p124 = scmp.ne.s32.totalorder %s107, %s123
    %p125 = scmp.eq.s32.totalorder %s15, 0
    %p126 = por %p124, %p125
    %p127 = scmp.le.s32.totalorder 1, %s9
    %p128 = scmp.lt.s32.totalorder %s9, 3
    %p129 = pnand %p127, %p128
    %p130 = pneg %p129
    // Predicated region
    $region9: #{seq_rcnn_c4_predictor_forward.1} parent=5 // pred_check
      _
    $region10: #{seq_rcnn_c4_predictor_forward.1} parent=5 // pred_check_branch
      %132 = sbr.rel (%p129) target = $region12
    $region11: #{seq_rcnn_c4_predictor_forward.1} parent=5 // pred_region
      %s133 = ssub.s32 %s9, 1
      // Predicated region
      $region13: #{seq_rcnn_c4_predictor_forward.1} parent=11 // pred_check
        %p134 = pneg %p70
      $region14: #{seq_rcnn_c4_predictor_forward.1} parent=11 // pred_check_branch
        %136 = sbr.rel (%p134) target = $region16
      $region15: #{seq_rcnn_c4_predictor_forward.1} parent=11 // pred_region
        _
      $region16: #{seq_rcnn_c4_predictor_forward.1} parent=11 // pred_fallthru
        _
      // Predicated region
      $region17: #{seq_rcnn_c4_predictor_forward.1} parent=11 // pred_check
        %p137 = pneg %p91
      $region18: #{seq_rcnn_c4_predictor_forward.1} parent=11 // pred_check_branch
        %139 = sbr.rel (%p137) target = $region20
      $region19: #{seq_rcnn_c4_predictor_forward.1} parent=11 // pred_region
        _
      $region20: #{seq_rcnn_c4_predictor_forward.1} parent=11 // pred_fallthru
        _
    $region12: #{seq_rcnn_c4_predictor_forward.1} parent=5 // pred_fallthru
      _
    %p140 = scmp.lt.s32.totalorder %s9, 2
    // Predicated region
    $region21: #{seq_rcnn_c4_predictor_forward.1} parent=5 // pred_check
      %p141 = pneg %p140
    $region22: #{seq_rcnn_c4_predictor_forward.1} parent=5 // pred_check_branch
      %143 = sbr.rel (%p141) target = $region24
    $region23: #{seq_rcnn_c4_predictor_forward.1} parent=5 // pred_region
      // Predicated region
      $region25: #{seq_rcnn_c4_predictor_forward.1} parent=23 // pred_check
        %p144 = pneg %p43
      $region26: #{seq_rcnn_c4_predictor_forward.1} parent=23 // pred_check_branch
        %146 = sbr.rel (%p144) target = $region28
      $region27: #{seq_rcnn_c4_predictor_forward.1} parent=23 // pred_region
        %s147 = smul.u32 2, %s17
        %p148 = scmp.lt.s32.totalorder %s16, 1
        %s149 = scalar_select %p148, %s16, 1
        %p150 = scmp.lt.s32.totalorder %s147, 1
        %s151 = scalar_select %p150, %s147, 1
        %s152 = smul.addr %s149, 8
        %s153 = sadd.s32 %s151, %s152
        %s154 = smul.addr %s153, 4
        %s155 = scalar_lea.vmem %s0, %s154
        %s156 = smul.u32 2, %s17
      $region28: #{seq_rcnn_c4_predictor_forward.1} parent=23 // pred_fallthru
        _
    $region24: #{seq_rcnn_c4_predictor_forward.1} parent=5 // pred_fallthru
      _
    %p157 = scmp.le.s32.totalorder 1, %s9
    %p158 = scmp.lt.s32.totalorder %s9, 3
    %p159 = pnand %p157, %p158
    %p160 = pneg %p159
    // Predicated region
    $region29: #{seq_rcnn_c4_predictor_forward.1} parent=5 // pred_check
      _
    $region30: #{seq_rcnn_c4_predictor_forward.1} parent=5 // pred_check_branch
      %162 = sbr.rel (%p159) target = $region32
    $region31: #{seq_rcnn_c4_predictor_forward.1} parent=5 // pred_region
      %s163 = ssub.s32 %s9, 1
      %s164 = smul.u32 2, %s19
      %p165 = scmp.lt.s32.totalorder %s18, 1
      %s166 = scalar_select %p165, %s18, 1
      %p167 = scmp.lt.s32.totalorder %s164, 1
      %s168 = scalar_select %p167, %s164, 1
      %s169 = smul.addr %s166, 8
      %s170 = sadd.s32 %s168, %s169
      %s171 = smul.addr %s170, 4
      %s172 = scalar_lea.vmem %s0, %s171
      %p173 = pneg %p49
      %p174 = pneg %p46
      %p175 = pneg %p70
      %p176 = pneg %p67
      %p177 = pneg %p91
      %p178 = pneg %p88
      %p179 = pneg %p119
      %p180 = pneg %p116
      %s181 = smul.u32 2, %s19
      %p182 = scmp.lt.s32.totalorder %s18, 1
      %s183 = scalar_select %p182, %s18, 1
      %p184 = scmp.lt.s32.totalorder %s181, 1
      %s185 = scalar_select %p184, %s181, 1
      %s186 = smul.addr %s183, 32
      %s187 = sadd.s32 %s185, %s186
      %s188 = smul.addr %s187, 8
      %s189 = scalar_lea.vmem %s3, %s188
      %s190 = smul.u32 2, %s19
      %p191 = scmp.lt.s32.totalorder %s18, 1
      %s192 = scalar_select %p191, %s18, 1
      %p193 = scmp.lt.s32.totalorder %s190, 1
      %s194 = scalar_select %p193, %s190, 1
      %s195 = smul.addr %s192, 8
      %s196 = sadd.s32 %s194, %s195
      %s197 = smul.addr %s196, 4
      %s198 = scalar_lea.vmem %s0, %s197
      %s199 = smul.u32 2, %s19
      %s200 = smul.u32 2, %s19
      %p201 = scmp.lt.s32.totalorder %s18, 1
      %s202 = scalar_select %p201, %s18, 1
      %p203 = scmp.lt.s32.totalorder %s200, 1
      %s204 = scalar_select %p203, %s200, 1
      %s205 = smul.addr %s202, 32
      %s206 = sadd.s32 %s204, %s205
      %s207 = smul.addr %s206, 8
      %s208 = scalar_lea.vmem %s3, %s207
      %s209 = smul.u32 2, %s19
      %v211 = vld [vmem:[%s1] sm:$0xf]
      %v212 = vld [vmem:[%s1 + $0x4] sm:$0xf]
      %v213 = vld [vmem:[%s1 + $0x8] sm:$0xf]
      %v214 = vld [vmem:[%s1 + $0xc] sm:$0xf]
      %v215 = vld [vmem:[%s1 + $0x10] sm:$0xf]
      %v216 = vld [vmem:[%s1 + $0x14] sm:$0xf]
      %v217 = vld [vmem:[%s1 + $0x18] sm:$0xf]
      %v218 = vld [vmem:[%s1 + $0x1c] sm:$0xf]
      %v219 = vld [vmem:[%s1 + $0x20] sm:$0xf]
      %v220 = vld [vmem:[%s1 + $0x24] sm:$0xf]
      %v221 = vld [vmem:[%s1 + $0x28] sm:$0xf]
      %v222 = vld [vmem:[%s1 + $0x2c] sm:$0xf]
      %v223 = vld [vmem:[%s1 + $0x30] sm:$0xf]
      %v224 = vld [vmem:[%s1 + $0x34] sm:$0xf]
      %v225 = vld [vmem:[%s1 + $0x38] sm:$0xf]
      %v226 = vld [vmem:[%s1 + $0x3c] sm:$0xf]
      %v227 = vld [vmem:[%s198] sm:$0xff]
      %v228 = vld [vmem:[%s198 + $0x8] sm:$0xff]
      %v229 = vld [vmem:[%s198 + $0x10] sm:$0xff]
      %v230 = vld [vmem:[%s198 + $0x18] sm:$0xff]
      %v231 = vld [vmem:[%s2] sm:$0xff]
      %v232 = vld [vmem:[%s2 + $0x8] sm:$0xff]
      %v233 = vld [vmem:[%s2 + $0x10] sm:$0xff]
      %v234 = vld [vmem:[%s2 + $0x18] sm:$0xff]
      %v235 = vld [vmem:[%s2 + $0x20] sm:$0xff]
      %v236 = vld [vmem:[%s2 + $0x28] sm:$0xff]
      %v237 = vld [vmem:[%s2 + $0x30] sm:$0xff]
      %v238 = vld [vmem:[%s2 + $0x38] sm:$0xff]
      %v239 = vld [vmem:[%s2 + $0x40] sm:$0xff]
      %v240 = vld [vmem:[%s2 + $0x48] sm:$0xff]
      %v241 = vld [vmem:[%s2 + $0x50] sm:$0xff]
      %v242 = vld [vmem:[%s2 + $0x58] sm:$0xff]
      %v243 = vld [vmem:[%s2 + $0x60] sm:$0xff]
      %v244 = vld [vmem:[%s2 + $0x68] sm:$0xff]
      %v245 = vld [vmem:[%s2 + $0x70] sm:$0xff]
      %v246 = vld [vmem:[%s2 + $0x78] sm:$0xff]
      %248 = vset.pattern.permute.xlu0 0
      %249 = vperm.xlu0 %248, %v231
      %v250 = vpop.permute.xlu0 %249
      %253 = vset.pattern.permute.xlu0 0
      %254 = vperm.xlu0 %253, %v232
      %v255 = vpop.permute.xlu0 %254
      %258 = vset.pattern.permute.xlu0 0
      %259 = vperm.xlu0 %258, %v233
      %v260 = vpop.permute.xlu0 %259
      %263 = vset.pattern.permute.xlu0 0
      %264 = vperm.xlu0 %263, %v234
      %v265 = vpop.permute.xlu0 %264
      %268 = vset.pattern.permute.xlu0 0
      %269 = vperm.xlu0 %268, %v235
      %v270 = vpop.permute.xlu0 %269
      %273 = vset.pattern.permute.xlu0 0
      %274 = vperm.xlu0 %273, %v236
      %v275 = vpop.permute.xlu0 %274
      %278 = vset.pattern.permute.xlu0 0
      %279 = vperm.xlu0 %278, %v237
      %v280 = vpop.permute.xlu0 %279
      %283 = vset.pattern.permute.xlu0 0
      %284 = vperm.xlu0 %283, %v238
      %v285 = vpop.permute.xlu0 %284
      %288 = vset.pattern.permute.xlu0 0
      %289 = vperm.xlu0 %288, %v239
      %v290 = vpop.permute.xlu0 %289
      %293 = vset.pattern.permute.xlu0 0
      %294 = vperm.xlu0 %293, %v240
      %v295 = vpop.permute.xlu0 %294
      %298 = vset.pattern.permute.xlu0 0
      %299 = vperm.xlu0 %298, %v241
      %v300 = vpop.permute.xlu0 %299
      %303 = vset.pattern.permute.xlu0 0
      %304 = vperm.xlu0 %303, %v242
      %v305 = vpop.permute.xlu0 %304
      %308 = vset.pattern.permute.xlu0 0
      %309 = vperm.xlu0 %308, %v243
      %v310 = vpop.permute.xlu0 %309
      %313 = vset.pattern.permute.xlu0 0
      %314 = vperm.xlu0 %313, %v244
      %v315 = vpop.permute.xlu0 %314
      %318 = vset.pattern.permute.xlu0 0
      %319 = vperm.xlu0 %318, %v245
      %v320 = vpop.permute.xlu0 %319
      %323 = vset.pattern.permute.xlu0 0
      %324 = vperm.xlu0 %323, %v246
      %v325 = vpop.permute.xlu0 %324
      %v343 = vunpack.c.l.b16 %v211
      %v344 = vunpack.c.l.b16 %v212
      %v345 = vunpack.c.l.b16 %v213
      %v346 = vunpack.c.l.b16 %v214
      %v347 = vunpack.c.l.b16 %v215
      %v348 = vunpack.c.l.b16 %v216
      %v349 = vunpack.c.l.b16 %v217
      %v350 = vunpack.c.l.b16 %v218
      %v351 = vunpack.c.l.b16 %v219
      %v352 = vunpack.c.l.b16 %v220
      %v353 = vunpack.c.l.b16 %v221
      %v354 = vunpack.c.l.b16 %v222
      %v355 = vunpack.c.l.b16 %v223
      %v356 = vunpack.c.l.b16 %v224
      %v357 = vunpack.c.l.b16 %v225
      %v358 = vunpack.c.l.b16 %v226
      %v359 = vpack.c.b16 %v344, %v343
      %v360 = vpack.c.b16 %v346, %v345
      %v361 = vpack.c.b16 %v348, %v347
      %v362 = vpack.c.b16 %v350, %v349
      %v363 = vpack.c.b16 %v352, %v351
      %v364 = vpack.c.b16 %v354, %v353
      %v365 = vpack.c.b16 %v356, %v355
      %v366 = vpack.c.b16 %v358, %v357
      %v371 = vunpack.c.l.b16 %v227
      %v372 = vunpack.c.h.b16 %v227
      %v373 = vunpack.c.l.b16 %v228
      %v374 = vunpack.c.h.b16 %v228
      %v375 = vunpack.c.l.b16 %v229
      %v376 = vunpack.c.h.b16 %v229
      %v377 = vunpack.c.l.b16 %v230
      %v378 = vunpack.c.h.b16 %v230
      %v379 = vpack.c.b16 %v373, %v371
      %v380 = vpack.c.b16 %v374, %v372
      %v381 = vpack.c.b16 %v377, %v375
      %v382 = vpack.c.b16 %v378, %v376
      %vm387 = vcmask 261120
      %v389 = vsel %vm387, %v359, 0
      %v392 = vsel %vm387, %v360, 0
      %v395 = vsel %vm387, %v361, 0
      %v398 = vsel %vm387, %v362, 0
      %v401 = vsel %vm387, %v363, 0
      %v404 = vsel %vm387, %v364, 0
      %v407 = vsel %vm387, %v365, 0
      %v410 = vsel %vm387, %v366, 0
      %412 = vmatprep.subr.bf16.mxu0 %v380
      %413 = vmatpush1.bf16.msra.mxu0 %v379
      %414 = vmatprep.subr.bf16.mxu0 %v382
      %415 = vmatpush1.bf16.msra.mxu0 %v381
      %416 = vmatprep.subr.bf16.mxu0 0
      %417 = vmatpush1.bf16.msra.mxu0 0
      %418 = vmatprep.subr.bf16.mxu0 0
      %419 = vmatpush1.bf16.msra.mxu0 0
      %420 = vmatprep.subr.bf16.mxu0 0
      %421 = vmatpush1.bf16.msra.mxu0 0
      %422 = vmatprep.subr.bf16.mxu0 0
      %423 = vmatpush1.bf16.msra.mxu0 0
      %424 = vmatprep.subr.bf16.mxu0 0
      %425 = vmatpush1.bf16.msra.mxu0 0
      %426 = vmatprep.subr.bf16.mxu0 0
      %427 = vmatpush1.bf16.msra.mxu0 0
      %428 = vmatprep.subr.bf16.mxu0 0
      %429 = vmatpush1.bf16.msra.mxu0 0
      %430 = vmatprep.subr.bf16.mxu0 0
      %431 = vmatpush1.bf16.msra.mxu0 0
      %432 = vmatprep.subr.bf16.mxu0 0
      %433 = vmatpush1.bf16.msra.mxu0 0
      %434 = vmatprep.subr.bf16.mxu0 0
      %435 = vmatpush1.bf16.msra.mxu0 0
      %436 = vmatprep.subr.bf16.mxu0 0
      %437 = vmatpush1.bf16.msra.mxu0 0
      %438 = vmatprep.subr.bf16.mxu0 0
      %439 = vmatpush1.bf16.msra.mxu0 0
      %440 = vmatprep.subr.bf16.mxu0 0
      %441 = vmatpush1.bf16.msra.mxu0 0
      %442 = vmatprep.subr.bf16.mxu0 0
      %443 = vmatpush1.bf16.msra.mxu0 0
      %444 = vmatprep.mubr.bf16.mxu0 0
      %445 = vmatmul.mubr.bf16.gmra.mrb[0].mxu0 %v389
      %v446 = vpop.f32.mrb[0].mxu0
      %v447 = vadd.f32 %v250, %v446
      %v448 = vpop.f32.mrb[0].mxu0
      %v449 = vadd.f32 %v250, %v448
      %v450 = vpop.f32.mrb[0].mxu0
      %v451 = vadd.f32 %v255, %v450
      %v452 = vpop.f32.mrb[0].mxu0
      %v453 = vadd.f32 %v255, %v452
      %454 = vmatprep.mubr.bf16.mxu0 0
      %455 = vmatmul.mubr.bf16.gmra.mrb[0].mxu0 %v392
      %v456 = vpop.f32.mrb[0].mxu0
      %v457 = vadd.f32 %v260, %v456
      %v458 = vpop.f32.mrb[0].mxu0
      %v459 = vadd.f32 %v260, %v458
      %v460 = vpop.f32.mrb[0].mxu0
      %v461 = vadd.f32 %v265, %v460
      %v462 = vpop.f32.mrb[0].mxu0
      %v463 = vadd.f32 %v265, %v462
      %464 = vmatprep.mubr.bf16.mxu0 0
      %465 = vmatmul.mubr.bf16.gmra.mrb[0].mxu0 %v395
      %v466 = vpop.f32.mrb[0].mxu0
      %v467 = vadd.f32 %v270, %v466
      %v468 = vpop.f32.mrb[0].mxu0
      %v469 = vadd.f32 %v270, %v468
      %v470 = vpop.f32.mrb[0].mxu0
      %v471 = vadd.f32 %v275, %v470
      %v472 = vpop.f32.mrb[0].mxu0
      %v473 = vadd.f32 %v275, %v472
      %474 = vmatprep.mubr.bf16.mxu0 0
      %475 = vmatmul.mubr.bf16.gmra.mrb[0].mxu0 %v398
      %v476 = vpop.f32.mrb[0].mxu0
      %v477 = vadd.f32 %v280, %v476
      %v478 = vpop.f32.mrb[0].mxu0
      %v479 = vadd.f32 %v280, %v478
      %v480 = vpop.f32.mrb[0].mxu0
      %v481 = vadd.f32 %v285, %v480
      %v482 = vpop.f32.mrb[0].mxu0
      %v483 = vadd.f32 %v285, %v482
      %484 = vmatprep.mubr.bf16.mxu0 0
      %485 = vmatmul.mubr.bf16.gmra.mrb[0].mxu0 %v401
      %v486 = vpop.f32.mrb[0].mxu0
      %v487 = vadd.f32 %v290, %v486
      %v488 = vpop.f32.mrb[0].mxu0
      %v489 = vadd.f32 %v290, %v488
      %v490 = vpop.f32.mrb[0].mxu0
      %v491 = vadd.f32 %v295, %v490
      %v492 = vpop.f32.mrb[0].mxu0
      %v493 = vadd.f32 %v295, %v492
      %494 = vmatprep.mubr.bf16.mxu0 0
      %495 = vmatmul.mubr.bf16.gmra.mrb[0].mxu0 %v404
      %v496 = vpop.f32.mrb[0].mxu0
      %v497 = vadd.f32 %v300, %v496
      %v498 = vpop.f32.mrb[0].mxu0
      %v499 = vadd.f32 %v300, %v498
      %v500 = vpop.f32.mrb[0].mxu0
      %v501 = vadd.f32 %v305, %v500
      %v502 = vpop.f32.mrb[0].mxu0
      %v503 = vadd.f32 %v305, %v502
      %504 = vmatprep.mubr.bf16.mxu0 0
      %505 = vmatmul.mubr.bf16.gmra.mrb[0].mxu0 %v407
      %v506 = vpop.f32.mrb[0].mxu0
      %v507 = vadd.f32 %v310, %v506
      %v508 = vpop.f32.mrb[0].mxu0
      %v509 = vadd.f32 %v310, %v508
      %v510 = vpop.f32.mrb[0].mxu0
      %v511 = vadd.f32 %v315, %v510
      %v512 = vpop.f32.mrb[0].mxu0
      %v513 = vadd.f32 %v315, %v512
      %514 = vmatprep.mubr.bf16.mxu0 0
      %515 = vmatmul.mubr.bf16.gmra.mrb[0].mxu0 %v410
      %v516 = vpop.f32.mrb[0].mxu0
      %v517 = vadd.f32 %v320, %v516
      %v518 = vpop.f32.mrb[0].mxu0
      %v519 = vadd.f32 %v320, %v518
      %v520 = vpop.f32.mrb[0].mxu0
      %v521 = vadd.f32 %v325, %v520
      %v522 = vpop.f32.mrb[0].mxu0
      %v523 = vadd.f32 %v325, %v522
      %524 = vdwg.mxu0
      %v525 = vmax.f32 %v447, 0.0
      %v526 = vmax.f32 %v449, 0.0
      %v527 = vmax.f32 %v451, 0.0
      %v528 = vmax.f32 %v453, 0.0
      %v529 = vmax.f32 %v457, 0.0
      %v530 = vmax.f32 %v459, 0.0
      %v531 = vmax.f32 %v461, 0.0
      %v532 = vmax.f32 %v463, 0.0
      %v533 = vmax.f32 %v467, 0.0
      %v534 = vmax.f32 %v469, 0.0
      %v535 = vmax.f32 %v471, 0.0
      %v536 = vmax.f32 %v473, 0.0
      %v537 = vmax.f32 %v477, 0.0
      %v538 = vmax.f32 %v479, 0.0
      %v539 = vmax.f32 %v481, 0.0
      %v540 = vmax.f32 %v483, 0.0
      %v541 = vmax.f32 %v487, 0.0
      %v542 = vmax.f32 %v489, 0.0
      %v543 = vmax.f32 %v491, 0.0
      %v544 = vmax.f32 %v493, 0.0
      %v545 = vmax.f32 %v497, 0.0
      %v546 = vmax.f32 %v499, 0.0
      %v547 = vmax.f32 %v501, 0.0
      %v548 = vmax.f32 %v503, 0.0
      %v549 = vmax.f32 %v507, 0.0
      %v550 = vmax.f32 %v509, 0.0
      %v551 = vmax.f32 %v511, 0.0
      %v552 = vmax.f32 %v513, 0.0
      %v553 = vmax.f32 %v517, 0.0
      %v554 = vmax.f32 %v519, 0.0
      %v555 = vmax.f32 %v521, 0.0
      %v556 = vmax.f32 %v523, 0.0
      %557 = vst [vmem:[%s208] sm:$0xff] %v525
      %558 = vst [vmem:[%s208 + $0x8] sm:$0xff] %v526
      %559 = vst [vmem:[%s208 + $0x10] sm:$0xff] %v527
      %560 = vst [vmem:[%s208 + $0x18] sm:$0xff] %v528
      %561 = vst [vmem:[%s208 + $0x20] sm:$0xff] %v529
      %562 = vst [vmem:[%s208 + $0x28] sm:$0xff] %v530
      %563 = vst [vmem:[%s208 + $0x30] sm:$0xff] %v531
      %564 = vst [vmem:[%s208 + $0x38] sm:$0xff] %v532
      %565 = vst [vmem:[%s208 + $0x40] sm:$0xff] %v533
      %566 = vst [vmem:[%s208 + $0x48] sm:$0xff] %v534
      %567 = vst [vmem:[%s208 + $0x50] sm:$0xff] %v535
      %568 = vst [vmem:[%s208 + $0x58] sm:$0xff] %v536
      %569 = vst [vmem:[%s208 + $0x60] sm:$0xff] %v537
      %570 = vst [vmem:[%s208 + $0x68] sm:$0xff] %v538
      %571 = vst [vmem:[%s208 + $0x70] sm:$0xff] %v539
      %572 = vst [vmem:[%s208 + $0x78] sm:$0xff] %v540
      %573 = vst [vmem:[%s208 + $0x80] sm:$0xff] %v541
      %574 = vst [vmem:[%s208 + $0x88] sm:$0xff] %v542
      %575 = vst [vmem:[%s208 + $0x90] sm:$0xff] %v543
      %576 = vst [vmem:[%s208 + $0x98] sm:$0xff] %v544
      %577 = vst [vmem:[%s208 + $0xa0] sm:$0xff] %v545
      %578 = vst [vmem:[%s208 + $0xa8] sm:$0xff] %v546
      %579 = vst [vmem:[%s208 + $0xb0] sm:$0xff] %v547
      %580 = vst [vmem:[%s208 + $0xb8] sm:$0xff] %v548
      %581 = vst [vmem:[%s208 + $0xc0] sm:$0xff] %v549
      %582 = vst [vmem:[%s208 + $0xc8] sm:$0xff] %v550
      %583 = vst [vmem:[%s208 + $0xd0] sm:$0xff] %v551
      %584 = vst [vmem:[%s208 + $0xd8] sm:$0xff] %v552
      %585 = vst [vmem:[%s208 + $0xe0] sm:$0xff] %v553
      %586 = vst [vmem:[%s208 + $0xe8] sm:$0xff] %v554
      %587 = vst [vmem:[%s208 + $0xf0] sm:$0xff] %v555
      %588 = vst [vmem:[%s208 + $0xf8] sm:$0xff] %v556
      %s589 = smul.u32 2, %s19
      %p590 = scmp.lt.s32.totalorder %s18, 1
      %s591 = scalar_select %p590, %s18, 1
      %p592 = scmp.lt.s32.totalorder %s589, 1
      %s593 = scalar_select %p592, %s589, 1
      %s594 = smul.addr %s591, 32
      %s595 = sadd.s32 %s593, %s594
      %s596 = smul.addr %s595, 8
      %s597 = scalar_lea.vmem %s3, %s596
      // Predicated region
      $region33: #{seq_rcnn_c4_predictor_forward.1} parent=31 // pred_check
        %p598 = pneg %p116
      $region34: #{seq_rcnn_c4_predictor_forward.1} parent=31 // pred_check_branch
        %600 = sbr.rel (%p598) target = $region36
      $region35: #{seq_rcnn_c4_predictor_forward.1} parent=31 // pred_region
        %s601 = smul.u32 2, %s19
      $region36: #{seq_rcnn_c4_predictor_forward.1} parent=31 // pred_fallthru
        _
    $region32: #{seq_rcnn_c4_predictor_forward.1} parent=5 // pred_fallthru
      _
    %p602 = scmp.le.s32.totalorder 2, %s9
    // Predicated region
    $region37: #{seq_rcnn_c4_predictor_forward.1} parent=5 // pred_check
      %p603 = pneg %p602
    $region38: #{seq_rcnn_c4_predictor_forward.1} parent=5 // pred_check_branch
      %605 = sbr.rel (%p603) target = $region40
    $region39: #{seq_rcnn_c4_predictor_forward.1} parent=5 // pred_region
      %s606 = ssub.s32 %s9, 2
      // Predicated region
      $region41: #{seq_rcnn_c4_predictor_forward.1} parent=39 // pred_check
        %p607 = pneg %p122
      $region42: #{seq_rcnn_c4_predictor_forward.1} parent=39 // pred_check_branch
        %609 = sbr.rel (%p607) target = $region44
      $region43: #{seq_rcnn_c4_predictor_forward.1} parent=39 // pred_region
        %s610 = smul.u32 2, %s21
        %p611 = scmp.lt.s32.totalorder %s20, 1
        %s612 = scalar_select %p611, %s20, 1
        %p613 = scmp.lt.s32.totalorder %s610, 1
        %s614 = scalar_select %p613, %s610, 1
        %s615 = smul.addr %s612, 32
        %s616 = sadd.s32 %s614, %s615
        %s617 = smul.addr %s616, 8
        %s618 = scalar_lea.vmem %s3, %s617
      $region44: #{seq_rcnn_c4_predictor_forward.1} parent=39 // pred_fallthru
        _
    $region40: #{seq_rcnn_c4_predictor_forward.1} parent=5 // pred_fallthru
      _
  $region6: #{seq_rcnn_c4_predictor_forward.1} parent=0 // loop_footer
    %s13 = sadd.s32 1, %s9
  $region7: #{seq_rcnn_c4_predictor_forward.1} parent=0 // loop_footer_branch
    %8 = sbr.rel target = $region3
  $region8: #{seq_rcnn_c4_predictor_forward.1} parent=0 // loop_exit
    _

</llo_original>
